<compile_context>
chip_gen: v5e
topology: v5e:2x2
jax: 0.10.0
libtpu: 0.0.40
codegen_flags: <defaults>
</compile_context>

<pallas_src>
import functools

import jax
import jax.numpy as jnp
from jax.experimental import pallas as pl
from jax.experimental.pallas import tpu as pltpu

EPS = 1e-8      # torch.nn.functional.cosine_similarity default eps
STATS = 128     # lane-dense width of the per-domain scalar-stats row


def _round_up(x, m):
    return (x + m - 1) // m * m


# --------------------------------------------------------------------------- #
# Call 1: per-domain projection + within-domain statistics (grid over domains) #
# --------------------------------------------------------------------------- #
def domain_stats_kernel(p1_ref, p2_ref, w_ref, b_ref,
                        mu_ref, mh_ref, sc_ref, *, t1, batch):
    B = batch
    inv_t1 = 1.0 / t1

    w = w_ref[0]                     # (Dtp, Dp)  this domain's projection weight
    bias = b_ref[0]                  # (1, Dp)

    # TODO(synk): the second text_encoder pass differs only via train-mode dropout in
    # the reference; here pooled2 is the deterministic stand-in passed by the wrapper.
    x1 = jnp.dot(p1_ref[...], w, preferred_element_type=jnp.float32) + bias   # (B, Dp)
    x2 = jnp.dot(p2_ref[...], w, preferred_element_type=jnp.float32) + bias   # (B, Dp)

    # Exact per-row normalisation (review item 1): rsqrt(max(|x|^2, EPS^2)) == 1/max(|x|, EPS)
    nsq1 = jnp.sum(x1 * x1, axis=1, keepdims=True)                            # (B, 1)
    nsq2 = jnp.sum(x2 * x2, axis=1, keepdims=True)
    xn1 = x1 * jax.lax.rsqrt(jnp.maximum(nsq1, EPS * EPS))
    xn2 = x2 * jax.lax.rsqrt(jnp.maximum(nsq2, EPS * EPS))

    sim_pos = jnp.sum(xn1 * xn2, axis=1, keepdims=True)                       # (B, 1)

    # Within-domain cosine gram -- the only gram this kernel ever builds (review 2/3).
    # bf16 operands, f32 accumulation (review item 8).
    a = xn1.astype(jnp.bfloat16)
    cos = jax.lax.dot_general(a, a, (((1,), (1,)), ((), ())),
                              preferred_element_type=jnp.float32)             # (B, B)

    r = jax.lax.broadcasted_iota(jnp.int32, (B, B), 0)
    c = jax.lax.broadcasted_iota(jnp.int32, (B, B), 1)

    # ---- FECM per-domain partial (reference semantics: domain-TOTAL negative sum) --
    e = jnp.exp(cos * inv_t1)
    neg = jnp.sum(jnp.sum(jnp.where(r != c, e, 0.0), axis=1, keepdims=True),
                  axis=0, keepdims=True)                                      # (1, 1)
    sp_t = sim_pos * inv_t1
    temp = sp_t - jnp.log(jnp.exp(sp_t) + neg)          # == log(pos_exp/(pos_exp+neg))
    info = -jnp.sum(temp, axis=0, keepdims=True) * (1.0 / B)                  # (1, 1)

    # ---- FDCM within-domain stat: mean of non-zero strict-upper cosines -----------
    up = (c > r) & (cos != 0.0)
    up_sum = jnp.sum(jnp.sum(jnp.where(up, cos, 0.0), axis=1, keepdims=True),
                     axis=0, keepdims=True)
    up_cnt = jnp.sum(jnp.sum(jnp.where(up, 1.0, 0.0), axis=1, keepdims=True),
                     axis=0, keepdims=True)
    up_mean = up_sum / jnp.maximum(up_cnt, 1.0)                               # (1, 1)

    # ---- per-domain means (lane-dense, unmasked full-tile stores) ------------------
    mu_ref[0] = jnp.sum(x1, axis=0, keepdims=True) * (1.0 / B)    # raw-feature mean
    mh_ref[0] = jnp.sum(xn1, axis=0, keepdims=True) * (1.0 / B)   # normalised-row mean

    lane = jax.lax.broadcasted_iota(jnp.int32, (1, sc_ref.shape[-1]), 1)
    sc_ref[0] = (jnp.where(lane == 0, info, 0.0)
                 + jnp.where(lane == 1, up_mean, 0.0))


# --------------------------------------------------------------------------- #
# Call 2: tiny grid-less epilogue (attd / sd softmax, NLL, final combine).     #
# --------------------------------------------------------------------------- #
def ctr_epilogue_kernel(mu_ref, mh_ref, sc_ref, t2_ref, out_ref, *, n_domains):
    N = n_domains
    t2 = t2_ref[0]                   # learnable temperature (SMEM scalar)
    inv_t2 = 1.0 / t2

    sc = sc_ref[...]                 # (N, STATS)
    info = sc[:, 0:1]                # (N, 1) per-domain InfoNCE partials
    up_mean = sc[:, 1:2]             # (N, 1) sd diagonal entries

    # ---- FECM: mean over domains ---------------------------------------------------
    fecm = jnp.sum(info, axis=0, keepdims=True) * (1.0 / N)                   # (1, 1)

    # ---- FDCM -----------------------------------------------------------------------
    mu = mu_ref[...]                 # (N, Dp)  raw-feature domain means
    mh = mh_ref[...]                 # (N, Dp)  normalised-row domain means

    nsq = jnp.sum(mu * mu, axis=1, keepdims=True)
    mun = mu * jax.lax.rsqrt(jnp.maximum(nsq, EPS * EPS))
    attd = jax.lax.dot_general(mun, mun, (((1,), (1,)), ((), ())),
                               preferred_element_type=jnp.float32)            # (N, N)

    za = attd * inv_t2
    za = za - jnp.max(za, axis=1, keepdims=True)
    ea = jnp.exp(za)
    attd_soft = ea / jnp.sum(ea, axis=1, keepdims=True)                        # probs <= 1

    # labels = attd_softmax.view(-1).long(): truncating a probability in (0, 1] gives
    # exactly 0 or 1 (1 only where a row puts probability exactly 1.0), so the NLL
    # gather collapses to one vectorised count (review item 9).
    cnt1 = jnp.sum(jnp.sum(jnp.where(attd_soft >= 1.0, 1.0, 0.0),
                           axis=1, keepdims=True), axis=0, keepdims=True)      # (1, 1)
    cnt0 = float(N * N) - cnt1

    # sd: diag = within-domain non-zero strict-upper mean (from call 1),
    #     off-diag = mean of the cross-domain cosine block = <mh_i, mh_j> (bilinearity).
    cross = jax.lax.dot_general(mh, mh, (((1,), (1,)), ((), ())),
                                preferred_element_type=jnp.float32)            # (N, N)
    rN = jax.lax.broadcasted_iota(jnp.int32, (N, N), 0)
    cN = jax.lax.broadcasted_iota(jnp.int32, (N, N), 1)
    sd = jnp.where(rN == cN, up_mean, cross)

    zs = sd * inv_t2
    zs = zs - jnp.max(zs, axis=1, keepdims=True)
    sd_log = zs - jnp.log(jnp.sum(jnp.exp(zs), axis=1, keepdims=True))   # log softmax

    # TODO(synk): NLLLoss(sd_log.view(-1), labels.view(-1)) with 1-D input AND 1-D
    # target is a source quirk; interpreted as mean_p of -sd_log.flat[labels.flat[p]],
    # which (labels in {0,1}) is a weighted sum of sd_log[0,0] and sd_log[0,1].
    fdcm = -(cnt0 * sd_log[0:1, 0:1] + cnt1 * sd_log[0:1, 1:2]) * (1.0 / (N * N))

    # Both loss scalars packed into one lane-dense output row (review item 10).
    lane = jax.lax.broadcasted_iota(jnp.int32, (1, out_ref.shape[-1]), 1)
    out_ref[...] = jnp.where(lane == 0, fecm, 0.0) + jnp.where(lane == 1, fdcm, 0.0)


# --------------------------------------------------------------------------- #
# Wrapper                                                                       #
# --------------------------------------------------------------------------- #
def ctr_losses(pooled1, pooled2, proj_w, proj_b, t2, *, t1):
    B, Dt = pooled1.shape
    N, _, D = proj_w.shape
    Dtp = _round_up(Dt, 128)
    Dp = _round_up(D, 128)

    # Zero-pad feature dims to 128-lane multiples (exact; review item 8).
    p1 = jnp.pad(pooled1.astype(jnp.float32), ((0, 0), (0, Dtp - Dt)))
    p2 = jnp.pad(pooled2.astype(jnp.float32), ((0, 0), (0, Dtp - Dt)))
    w = jnp.pad(proj_w.astype(jnp.float32), ((0, 0), (0, Dtp - Dt), (0, Dp - D)))
    b = jnp.pad(jnp.reshape(proj_b.astype(jnp.float32), (N, 1, D)),
                ((0, 0), (0, 0), (0, Dp - D)))

    # Explicit VMEM budget sized to the per-step working set (review item 11).
    f32 = 4
    work = (4 * B * Dtp + 2 * (Dtp * Dp + Dp) + 10 * B * Dp + 10 * B * B
            + 4 * (2 * Dp + STATS)) * f32
    vmem_limit = int(min(max(4 * work, 16 * 1024 * 1024), 50 * 1024 * 1024))

    stats_kernel = functools.partial(domain_stats_kernel, t1=float(t1), batch=int(B))
    mu3, mh3, sc3 = pl.pallas_call(
        stats_kernel,
        grid=(N,),
        in_specs=[
            pl.BlockSpec((B, Dtp), lambda i: (0, 0)),          # pooled pass 1
            pl.BlockSpec((B, Dtp), lambda i: (0, 0)),          # pooled pass 2
            pl.BlockSpec((1, Dtp, Dp), lambda i: (i, 0, 0)),   # per-domain weight
            pl.BlockSpec((1, 1, Dp), lambda i: (i, 0, 0)),     # per-domain bias
        ],
        out_specs=(
            pl.BlockSpec((1, 1, Dp), lambda i: (i, 0, 0)),     # raw-feature means
            pl.BlockSpec((1, 1, Dp), lambda i: (i, 0, 0)),     # normalised-row means
            pl.BlockSpec((1, 1, STATS), lambda i: (i, 0, 0)),  # [infoNCE_i, up_mean_i]
        ),
        out_shape=(
            jax.ShapeDtypeStruct((N, 1, Dp), jnp.float32),
            jax.ShapeDtypeStruct((N, 1, Dp), jnp.float32),
            jax.ShapeDtypeStruct((N, 1, STATS), jnp.float32),
        ),
        compiler_params=pltpu.CompilerParams(
            dimension_semantics=("parallel",),                 # v7x: both TensorCores
            vmem_limit_bytes=vmem_limit,
        ),
    )(p1, p2, w, b)

    # Cheap XLA-level squeezes between the two calls (no in-kernel relayouts).
    mu = jnp.reshape(mu3, (N, Dp))
    mh = jnp.reshape(mh3, (N, Dp))
    sc = jnp.reshape(sc3, (N, STATS))

    epi_kernel = functools.partial(ctr_epilogue_kernel, n_domains=int(N))
    packed = pl.pallas_call(
        epi_kernel,
        in_specs=[
            pl.BlockSpec(memory_space=pltpu.MemorySpace.VMEM),
            pl.BlockSpec(memory_space=pltpu.MemorySpace.VMEM),
            pl.BlockSpec(memory_space=pltpu.MemorySpace.VMEM),
            pl.BlockSpec(memory_space=pltpu.MemorySpace.SMEM),   # t2 scalar
        ],
        out_specs=pl.BlockSpec(memory_space=pltpu.MemorySpace.VMEM),
        out_shape=jax.ShapeDtypeStruct((1, STATS), jnp.float32),
    )(mu, mh, sc, jnp.reshape(t2, (1,)).astype(jnp.float32))

    return packed[0, 0], packed[0, 1]


# --------------------------------------------------------------------------- #
# Model forward (glue in plain JAX, all loss compute in the Pallas kernels).    #
# --------------------------------------------------------------------------- #
def forward(params, batch, cfg):
    # TODO(synk): TextEncoder (pretrained BERT / SFR backbone) is external to this
    # module; stand-in = masked mean-pooled token embeddings (projection heads are
    # applied per-domain inside the Pallas kernel).
    emb = params["tok_emb"][batch["input_ids"]]                          # (B, L, Dt)
    m = batch["attention_mask"][..., None].astype(jnp.float32)           # (B, L, 1)
    pooled = jnp.sum(emb * m, axis=1) / jnp.maximum(jnp.sum(m, axis=1), 1.0)  # (B, Dt)

    # TODO(synk): the reference runs the text encoder twice (train-mode dropout);
    # the deterministic stand-in makes both passes identical.
    pooled1 = pooled
    pooled2 = pooled

    fecm, fdcm = ctr_losses(pooled1, pooled2, params["proj_w"], params["proj_b"],
                            params["t2"], t1=cfg["t1"])
    # TODO(synk): RecEncoder_DCNv2.modal_forward (MCM loss) is not defined in the source file.
    mcm = jnp.float32(0.0)

    total_loss = [cfg["alpha"] * fecm, cfg["beta"] * fdcm, cfg["gamma"] * mcm]
    return total_loss, params["t2"]


if __name__ == "__main__":
    B, L, V, Dt, D, N = 8, 8, 50, 32, 32, 3  # batch, seq, vocab, text dim, emb dim, domains
    cfg = dict(alpha=1.0, beta=1.0, gamma=1.0, t1=0.5)

    key = jax.random.PRNGKey(0)
    k1, k2, k3, k4 = jax.random.split(key, 4)
    params = {
        "tok_emb": jax.random.normal(k1, (V, Dt), jnp.float32) * 0.1,
        "proj_w": jax.random.normal(k2, (N, Dt, D), jnp.float32) * 0.1,
        "proj_b": jax.random.normal(k3, (N, 1, D), jnp.float32) * 0.01,
        "t2": jnp.float32(1.0),  # nn.Parameter(torch.tensor(1.0))
    }

    input_ids = jax.random.randint(k4, (B, L), 0, V, dtype=jnp.int32)
    lengths = jnp.array([8, 7, 6, 5, 8, 7, 6, 5], jnp.int32)
    attention_mask = (jnp.arange(L)[None, :] < lengths[:, None]).astype(jnp.int32)
    batch = dict(input_ids=input_ids, attention_mask=attention_mask)

    total_loss, t2 = forward(params, batch, cfg)
    total_loss = [jax.block_until_ready(x) for x in total_loss]
    jax.block_until_ready(t2)

    assert all(bool(jnp.isfinite(x)) for x in total_loss)
    print("KERNEL_OK")
</pallas_src>

<mosaic_0001>
module attributes {stable_mosaic.version = 11 : i64} {
  func.func @domain_stats_kernel(%arg0: i32, %arg1: memref<8x128xf32, #tpu.memory_space<vmem>>, %arg2: memref<8x128xf32, #tpu.memory_space<vmem>>, %arg3: memref<1x128x128xf32, #tpu.memory_space<vmem>>, %arg4: memref<1x1x128xf32, #tpu.memory_space<vmem>>, %arg5: memref<1x1x128xf32, #tpu.memory_space<vmem>>, %arg6: memref<1x1x128xf32, #tpu.memory_space<vmem>>, %arg7: memref<1x1x128xf32, #tpu.memory_space<vmem>>) attributes {dimension_semantics = [#tpu.dimension_semantics<parallel>], iteration_bounds = array<i64: 3>, scalar_prefetch = 0 : i64, scratch_operands = 0 : i64, tpu.core_type = #tpu.core_type<tc>, window_params = [{pipeline_mode = #tpu.pipeline_mode<synchronous>, transform_indices = @transform_0, window_bounds = array<i64: 8, 128>}, {pipeline_mode = #tpu.pipeline_mode<synchronous>, transform_indices = @transform_1, window_bounds = array<i64: 8, 128>}, {transform_indices = @transform_2, window_bounds = array<i64: 1, 128, 128>}, {transform_indices = @transform_3, window_bounds = array<i64: 1, 1, 128>}, {transform_indices = @transform_4, window_bounds = array<i64: 1, 1, 128>}, {transform_indices = @transform_5, window_bounds = array<i64: 1, 1, 128>}, {transform_indices = @transform_6, window_bounds = array<i64: 1, 1, 128>}]} {
    %c0 = arith.constant 0 : index
    %c0_0 = arith.constant 0 : index
    %c0_1 = arith.constant 0 : index
    %0 = vector.load %arg3[%c0, %c0_0, %c0_1] : memref<1x128x128xf32, #tpu.memory_space<vmem>>, vector<1x128x128xf32>
    %1 = vector.shape_cast %0 : vector<1x128x128xf32> to vector<128x128xf32>
    %c0_2 = arith.constant 0 : index
    %c0_3 = arith.constant 0 : index
    %c0_4 = arith.constant 0 : index
    %2 = vector.load %arg4[%c0_2, %c0_3, %c0_4] : memref<1x1x128xf32, #tpu.memory_space<vmem>>, vector<1x1x128xf32>
    %3 = vector.shape_cast %2 : vector<1x1x128xf32> to vector<1x128xf32>
    %c0_5 = arith.constant 0 : index
    %c0_6 = arith.constant 0 : index
    %4 = vector.load %arg1[%c0_5, %c0_6] : memref<8x128xf32, #tpu.memory_space<vmem>>, vector<8x128xf32>
    %cst = arith.constant dense<0.000000e+00> : vector<8x128xf32>
    %5 = tpu.matmul %4, %1, %cst {dimension_numbers = #tpu.dot_dimension_numbers<[1], [0], [0], [1], [0, 0, 1, 1], [], []>} : vector<8x128xf32>, vector<128x128xf32>, vector<8x128xf32> -> vector<8x128xf32>
    %6 = vector.broadcast %3 : vector<1x128xf32> to vector<8x128xf32>
    %7 = arith.addf %5, %6 : vector<8x128xf32>
    %c0_7 = arith.constant 0 : index
    %c0_8 = arith.constant 0 : index
    %8 = vector.load %arg2[%c0_7, %c0_8] : memref<8x128xf32, #tpu.memory_space<vmem>>, vector<8x128xf32>
    %cst_9 = arith.constant dense<0.000000e+00> : vector<8x128xf32>
    %9 = tpu.matmul %8, %1, %cst_9 {dimension_numbers = #tpu.dot_dimension_numbers<[1], [0], [0], [1], [0, 0, 1, 1], [], []>} : vector<8x128xf32>, vector<128x128xf32>, vector<8x128xf32> -> vector<8x128xf32>
    %10 = vector.broadcast %3 : vector<1x128xf32> to vector<8x128xf32>
    %11 = arith.addf %9, %10 : vector<8x128xf32>
    %12 = arith.mulf %7, %7 : vector<8x128xf32>
    %cst_10 = arith.constant dense<0.000000e+00> : vector<8xf32>
    %13 = vector.multi_reduction <add>, %12, %cst_10 [1] : vector<8x128xf32> to vector<8xf32>
    %14 = vector.shape_cast %13 : vector<8xf32> to vector<8x1xf32>
    %15 = arith.mulf %11, %11 : vector<8x128xf32>
    %cst_11 = arith.constant dense<0.000000e+00> : vector<8xf32>
    %16 = vector.multi_reduction <add>, %15, %cst_11 [1] : vector<8x128xf32> to vector<8xf32>
    %17 = vector.shape_cast %16 : vector<8xf32> to vector<8x1xf32>
    %cst_12 = arith.constant 1.000000e-16 : f32
    %18 = vector.broadcast %cst_12 : f32 to vector<8x1xf32>
    %19 = arith.maximumf %14, %18 : vector<8x1xf32>
    %20 = math.rsqrt %19 : vector<8x1xf32>
    %21 = vector.broadcast %20 : vector<8x1xf32> to vector<8x128xf32>
    %22 = arith.mulf %7, %21 : vector<8x128xf32>
    %cst_13 = arith.constant 1.000000e-16 : f32
    %23 = vector.broadcast %cst_13 : f32 to vector<8x1xf32>
    %24 = arith.maximumf %17, %23 : vector<8x1xf32>
    %25 = math.rsqrt %24 : vector<8x1xf32>
    %26 = vector.broadcast %25 : vector<8x1xf32> to vector<8x128xf32>
    %27 = arith.mulf %11, %26 : vector<8x128xf32>
    %28 = arith.mulf %22, %27 : vector<8x128xf32>
    %cst_14 = arith.constant dense<0.000000e+00> : vector<8xf32>
    %29 = vector.multi_reduction <add>, %28, %cst_14 [1] : vector<8x128xf32> to vector<8xf32>
    %30 = vector.shape_cast %29 : vector<8xf32> to vector<8x1xf32>
    %31 = arith.truncf %22 : vector<8x128xf32> to vector<8x128xbf16>
    %cst_15 = arith.constant dense<0.000000e+00> : vector<8x8xf32>
    %32 = tpu.matmul %31, %31, %cst_15 {dimension_numbers = #tpu.dot_dimension_numbers<[1], [1], [0], [0], [0, 0, 1, 0], [], []>} : vector<8x128xbf16>, vector<8x128xbf16>, vector<8x8xf32> -> vector<8x8xf32>
    %33 = tpu.iota {dimensions = array<i32: 0>} : vector<8x8xi32>
    %34 = tpu.iota {dimensions = array<i32: 1>} : vector<8x8xi32>
    %cst_16 = arith.constant 2.000000e+00 : f32
    %35 = vector.broadcast %cst_16 : f32 to vector<8x8xf32>
    %36 = arith.mulf %32, %35 : vector<8x8xf32>
    %37 = math.exp %36 : vector<8x8xf32>
    %38 = arith.cmpi ne, %33, %34 : vector<8x8xi32>
    %cst_17 = arith.constant 0.000000e+00 : f32
    %39 = vector.broadcast %cst_17 : f32 to vector<8x8xf32>
    %40 = arith.select %38, %37, %39 : vector<8x8xi1>, vector<8x8xf32>
    %cst_18 = arith.constant dense<0.000000e+00> : vector<8xf32>
    %41 = vector.multi_reduction <add>, %40, %cst_18 [1] : vector<8x8xf32> to vector<8xf32>
    %42 = vector.shape_cast %41 : vector<8xf32> to vector<8x1xf32>
    %cst_19 = arith.constant dense<0.000000e+00> : vector<1xf32>
    %43 = vector.multi_reduction <add>, %42, %cst_19 [0] : vector<8x1xf32> to vector<1xf32>
    %44 = vector.shape_cast %43 : vector<1xf32> to vector<1x1xf32>
    %cst_20 = arith.constant 2.000000e+00 : f32
    %45 = vector.broadcast %cst_20 : f32 to vector<8x1xf32>
    %46 = arith.mulf %30, %45 : vector<8x1xf32>
    %47 = math.exp %46 : vector<8x1xf32>
    %48 = vector.broadcast %44 : vector<1x1xf32> to vector<8x1xf32>
    %49 = arith.addf %47, %48 : vector<8x1xf32>
    %50 = math.log %49 : vector<8x1xf32>
    %51 = arith.subf %46, %50 : vector<8x1xf32>
    %cst_21 = arith.constant dense<0.000000e+00> : vector<1xf32>
    %52 = vector.multi_reduction <add>, %51, %cst_21 [0] : vector<8x1xf32> to vector<1xf32>
    %53 = vector.shape_cast %52 : vector<1xf32> to vector<1x1xf32>
    %cst_22 = arith.constant 0.000000e+00 : f32
    %54 = vector.broadcast %cst_22 : f32 to vector<1x1xf32>
    %55 = arith.subf %54, %53 : vector<1x1xf32>
    %cst_23 = arith.constant 1.250000e-01 : f32
    %56 = vector.broadcast %cst_23 : f32 to vector<1x1xf32>
    %57 = arith.mulf %55, %56 : vector<1x1xf32>
    %58 = arith.cmpi sgt, %34, %33 : vector<8x8xi32>
    %cst_24 = arith.constant 0.000000e+00 : f32
    %59 = vector.broadcast %cst_24 : f32 to vector<8x8xf32>
    %60 = arith.cmpf one, %32, %59 : vector<8x8xf32>
    %61 = arith.andi %58, %60 : vector<8x8xi1>
    %cst_25 = arith.constant 0.000000e+00 : f32
    %62 = vector.broadcast %cst_25 : f32 to vector<8x8xf32>
    %63 = arith.select %61, %32, %62 : vector<8x8xi1>, vector<8x8xf32>
    %cst_26 = arith.constant dense<0.000000e+00> : vector<8xf32>
    %64 = vector.multi_reduction <add>, %63, %cst_26 [1] : vector<8x8xf32> to vector<8xf32>
    %65 = vector.shape_cast %64 : vector<8xf32> to vector<8x1xf32>
    %cst_27 = arith.constant dense<0.000000e+00> : vector<1xf32>
    %66 = vector.multi_reduction <add>, %65, %cst_27 [0] : vector<8x1xf32> to vector<1xf32>
    %67 = vector.shape_cast %66 : vector<1xf32> to vector<1x1xf32>
    %cst_28 = arith.constant 1.000000e+00 : f32
    %cst_29 = arith.constant 0.000000e+00 : f32
    %68 = vector.broadcast %cst_28 : f32 to vector<8x8xf32>
    %69 = vector.broadcast %cst_29 : f32 to vector<8x8xf32>
    %70 = arith.select %61, %68, %69 : vector<8x8xi1>, vector<8x8xf32>
    %cst_30 = arith.constant dense<0.000000e+00> : vector<8xf32>
    %71 = vector.multi_reduction <add>, %70, %cst_30 [1] : vector<8x8xf32> to vector<8xf32>
    %72 = vector.shape_cast %71 : vector<8xf32> to vector<8x1xf32>
    %cst_31 = arith.constant dense<0.000000e+00> : vector<1xf32>
    %73 = vector.multi_reduction <add>, %72, %cst_31 [0] : vector<8x1xf32> to vector<1xf32>
    %74 = vector.shape_cast %73 : vector<1xf32> to vector<1x1xf32>
    %cst_32 = arith.constant 1.000000e+00 : f32
    %75 = vector.broadcast %cst_32 : f32 to vector<1x1xf32>
    %76 = arith.maximumf %74, %75 : vector<1x1xf32>
    %77 = arith.divf %67, %76 : vector<1x1xf32>
    %cst_33 = arith.constant dense<0.000000e+00> : vector<128xf32>
    %78 = vector.multi_reduction <add>, %7, %cst_33 [0] : vector<8x128xf32> to vector<128xf32>
    %79 = vector.shape_cast %78 : vector<128xf32> to vector<1x128xf32>
    %cst_34 = arith.constant 1.250000e-01 : f32
    %80 = vector.broadcast %cst_34 : f32 to vector<1x128xf32>
    %81 = arith.mulf %79, %80 : vector<1x128xf32>
    %c0_35 = arith.constant 0 : index
    %c0_36 = arith.constant 0 : index
    %c0_37 = arith.constant 0 : index
    %82 = vector.load %arg5[%c0_35, %c0_36, %c0_37] : memref<1x1x128xf32, #tpu.memory_space<vmem>>, vector<1x1x128xf32>
    %83 = vector.shape_cast %82 : vector<1x1x128xf32> to vector<1x128xf32>
    %84 = vector.shape_cast %81 : vector<1x128xf32> to vector<1x1x128xf32>
    tpu.vector_store %arg5[%c0_35, %c0_36, %c0_37], %84 {strides = array<i32>} : memref<1x1x128xf32, #tpu.memory_space<vmem>>, vector<1x1x128xf32>,
    %cst_38 = arith.constant dense<0.000000e+00> : vector<128xf32>
    %85 = vector.multi_reduction <add>, %22, %cst_38 [0] : vector<8x128xf32> to vector<128xf32>
    %86 = vector.shape_cast %85 : vector<128xf32> to vector<1x128xf32>
    %cst_39 = arith.constant 1.250000e-01 : f32
    %87 = vector.broadcast %cst_39 : f32 to vector<1x128xf32>
    %88 = arith.mulf %86, %87 : vector<1x128xf32>
    %c0_40 = arith.constant 0 : index
    %c0_41 = arith.constant 0 : index
    %c0_42 = arith.constant 0 : index
    %89 = vector.load %arg6[%c0_40, %c0_41, %c0_42] : memref<1x1x128xf32, #tpu.memory_space<vmem>>, vector<1x1x128xf32>
    %90 = vector.shape_cast %89 : vector<1x1x128xf32> to vector<1x128xf32>
    %91 = vector.shape_cast %88 : vector<1x128xf32> to vector<1x1x128xf32>
    tpu.vector_store %arg6[%c0_40, %c0_41, %c0_42], %91 {strides = array<i32>} : memref<1x1x128xf32, #tpu.memory_space<vmem>>, vector<1x1x128xf32>,
    %92 = tpu.iota {dimensions = array<i32: 1>} : vector<1x128xi32>
    %c0_i32 = arith.constant 0 : i32
    %93 = vector.broadcast %c0_i32 : i32 to vector<1x128xi32>
    %94 = arith.cmpi eq, %92, %93 : vector<1x128xi32>
    %cst_43 = arith.constant 0.000000e+00 : f32
    %95 = vector.shape_cast %57 : vector<1x1xf32> to vector<1x1xf32>
    %96 = vector.broadcast %95 : vector<1x1xf32> to vector<1x128xf32>
    %97 = vector.broadcast %cst_43 : f32 to vector<1x128xf32>
    %98 = arith.select %94, %96, %97 : vector<1x128xi1>, vector<1x128xf32>
    %c1_i32 = arith.constant 1 : i32
    %99 = vector.broadcast %c1_i32 : i32 to vector<1x128xi32>
    %100 = arith.cmpi eq, %92, %99 : vector<1x128xi32>
    %cst_44 = arith.constant 0.000000e+00 : f32
    %101 = vector.shape_cast %77 : vector<1x1xf32> to vector<1x1xf32>
    %102 = vector.broadcast %101 : vector<1x1xf32> to vector<1x128xf32>
    %103 = vector.broadcast %cst_44 : f32 to vector<1x128xf32>
    %104 = arith.select %100, %102, %103 : vector<1x128xi1>, vector<1x128xf32>
    %105 = arith.addf %98, %104 : vector<1x128xf32>
    %c0_45 = arith.constant 0 : index
    %c0_46 = arith.constant 0 : index
    %c0_47 = arith.constant 0 : index
    %106 = vector.load %arg7[%c0_45, %c0_46, %c0_47] : memref<1x1x128xf32, #tpu.memory_space<vmem>>, vector<1x1x128xf32>
    %107 = vector.shape_cast %106 : vector<1x1x128xf32> to vector<1x128xf32>
    %108 = vector.shape_cast %105 : vector<1x128xf32> to vector<1x1x128xf32>
    tpu.vector_store %arg7[%c0_45, %c0_46, %c0_47], %108 {strides = array<i32>} : memref<1x1x128xf32, #tpu.memory_space<vmem>>, vector<1x1x128xf32>,
    return
  }
  func.func @transform_0(%arg0: i32) -> (i32, i32) {
    %c0_i32 = arith.constant 0 : i32
    %c0_i32_0 = arith.constant 0 : i32
    %c0_i32_1 = arith.constant 0 : i32
    return %c0_i32, %c0_i32_0 : i32, i32
  }
  func.func @transform_1(%arg0: i32) -> (i32, i32) {
    %c0_i32 = arith.constant 0 : i32
    %c0_i32_0 = arith.constant 0 : i32
    %c0_i32_1 = arith.constant 0 : i32
    return %c0_i32, %c0_i32_0 : i32, i32
  }
  func.func @transform_2(%arg0: i32) -> (i32, i32, i32) {
    %c0_i32 = arith.constant 0 : i32
    %c0_i32_0 = arith.constant 0 : i32
    %c0_i32_1 = arith.constant 0 : i32
    return %arg0, %c0_i32, %c0_i32_0 : i32, i32, i32
  }
  func.func @transform_3(%arg0: i32) -> (i32, i32, i32) {
    %c0_i32 = arith.constant 0 : i32
    %c0_i32_0 = arith.constant 0 : i32
    %c0_i32_1 = arith.constant 0 : i32
    return %arg0, %c0_i32, %c0_i32_0 : i32, i32, i32
  }
  func.func @transform_4(%arg0: i32) -> (i32, i32, i32) {
    %c0_i32 = arith.constant 0 : i32
    %c0_i32_0 = arith.constant 0 : i32
    %c0_i32_1 = arith.constant 0 : i32
    return %arg0, %c0_i32, %c0_i32_0 : i32, i32, i32
  }
  func.func @transform_5(%arg0: i32) -> (i32, i32, i32) {
    %c0_i32 = arith.constant 0 : i32
    %c0_i32_0 = arith.constant 0 : i32
    %c0_i32_1 = arith.constant 0 : i32
    return %arg0, %c0_i32, %c0_i32_0 : i32, i32, i32
  }
  func.func @transform_6(%arg0: i32) -> (i32, i32, i32) {
    %c0_i32 = arith.constant 0 : i32
    %c0_i32_0 = arith.constant 0 : i32
    %c0_i32_1 = arith.constant 0 : i32
    return %arg0, %c0_i32, %c0_i32_0 : i32, i32, i32
  }
}

</mosaic_0001>

<llo_original>
// kernel: tpu_custom_call.1
$region0: #{tpu_custom_call.1}
  #allocation0 [shape = 'u32[]', space=smem, size = 0x4, offset = 0x4, fixed_abs, tag = 'smem constant byte address 0x4 - core index']
  #allocation1 [shape = 'u32[72,128]{1,0:T(1,128)}', space=vmem, size = 0x9000, scoped, tag = 'internal scratch']
  %s0 = inlined_call_operand.hbm [shape: f32[8,128], index: 0, kind: input, shape index: {}]
  %s1 = inlined_call_operand.hbm [shape: f32[8,128], index: 1, kind: input, shape index: {}]
  %s2 = inlined_call_operand.hbm [shape: f32[3,128,128], index: 2, kind: input, shape index: {}]
  %s3 = inlined_call_operand.hbm [shape: f32[3,1,128], index: 3, kind: input, shape index: {}]
  %s4 = inlined_call_operand.hbm [shape: f32[3,1,128], index: 4, kind: output, shape index: {0}]
  %s5 = inlined_call_operand.hbm [shape: f32[3,1,128], index: 5, kind: output, shape index: {1}]
  %s6 = inlined_call_operand.hbm [shape: f32[3,1,128], index: 6, kind: output, shape index: {2}]
  %7 = xla_tuple %s4, %s5, %s6
  %s8 = sld [smem:[#allocation0]]
  $region81: #{tpu_custom_call.1} parent=0
    _
  %s10 = ssub.s32 1, %s8
  %s11 = scalar_select 0, %s10, %s8
  $region1: #{tpu_custom_call.1} parent=0
    #allocation2 [shape = 'u8[4096]{0}', space=vmem, size = 0x1000, scoped, tag = 'input window, operand 0, single buffered']
    #allocation3 [shape = 's32[2]{0}', space=sflag, size = 0x8, scoped, tag = 'scoped memory for tpu_custom_call.1']
    #allocation4 [shape = 's32[2]{0}', space=sflag, size = 0x8, scoped, tag = 'scoped memory for tpu_custom_call.1']
    #allocation5 [shape = 'u8[4096]{0}', space=vmem, size = 0x1000, scoped, tag = 'input window, operand 1, single buffered']
    #allocation6 [shape = 's32[1]{0}', space=sflag, size = 0x4, scoped, tag = 'scoped memory for tpu_custom_call.1']
    #allocation7 [shape = 'u8[131072]{0}', space=vmem, size = 0x20000, scoped, tag = 'input window, operand 2']
    #allocation8 [shape = 'u8[1024]{0}', space=vmem, size = 0x400, scoped, tag = 'input window, operand 3']
    #allocation9 [shape = 'u8[1024]{0}', space=vmem, size = 0x400, scoped, tag = 'output window, operand 0']
    #allocation10 [shape = 'u8[1024]{0}', space=vmem, size = 0x400, scoped, tag = 'output window, operand 1']
    #allocation11 [shape = 's32[2]{0}', space=sflag, size = 0x8, scoped, tag = 'scoped memory for tpu_custom_call.1']
    #allocation12 [shape = 'u8[1024]{0}', space=vmem, size = 0x400, scoped, tag = 'output window, operand 2']
    %12 = vsyncpa [#allocation3], 0
    %13 = vsyncpa [#allocation6], 0
    %14 = vsyncpa [#allocation4], 0
    %s15 = scalar_lea.sflag [#allocation4], 1
    %16 = vsyncpa %s15, 0
    %17 = vsyncpa [#allocation11], 0
    %s18 = scalar_lea.sflag [#allocation11], 1
    %19 = vsyncpa %s18, 0
    loop: start=0, step=1, limit=5
    $region2: #{tpu_custom_call.1} parent=1 // loop_pre_header
      _
    $region3: #{tpu_custom_call.1} parent=1 // loop_header
      %s21 = sphi 0, %s25
      %p22 = scmp.ge.s32.totalorder %s21, 5
      %s29 = sphi 0, %s29
      %s31 = sphi 0, %s29
      %s32 = sphi 0, %s31
      %s46 = sphi 0, %s32
      %s50 = sphi 0, %s50
      %s52 = sphi 0, %s50
      %s53 = sphi 0, %s52
      %s67 = sphi 0, %s53
      %s73 = sphi 0, %s75
      %s76 = sphi 0, %s73
      %s77 = sphi 0, %s76
      %s93 = sphi 0, %s77
      %s99 = sphi 0, %s101
      %s102 = sphi 0, %s99
      %s103 = sphi 0, %s102
      %s119 = sphi 0, %s103
      %s125 = sphi 0, %s127
      %s128 = sphi 0, %s125
      %s129 = sphi 0, %s128
      %s145 = sphi 0, %s129
      %s151 = sphi 0, %s153
      %s154 = sphi 0, %s151
      %s155 = sphi 0, %s154
      %s171 = sphi 0, %s155
      %s177 = sphi 0, %s179
      %s180 = sphi 0, %s177
      %s181 = sphi 0, %s180
      %s197 = sphi 0, %s181
    $region4: #{tpu_custom_call.1} parent=1 // loop_header_branch
      %24 = sbr.rel (%p22) target = $region8
    $region5: #{tpu_custom_call.1} parent=1 // loop_body
      %s26 = ssub.s32 %s21, 1
      %s27 = ssub.s32 %s21, 2
      %s28 = sadd.s32 %s21, 1
      %s30 = sadd.s32 %s29, 1
      %p33 = scmp.eq.s32.totalorder %s21, 2
      %p34 = scmp.ne.s32.totalorder %s29, %s31
      %p35 = scmp.eq.s32.totalorder %s21, 0
      %p36 = por %p34, %p35
      %p37 = scmp.ne.s32.totalorder %s29, %s31
      %p38 = scmp.eq.s32.totalorder %s26, 2
      %p39 = por %p37, %p38
      %p40 = scmp.ne.s32.totalorder %s31, %s32
      %p41 = scmp.eq.s32.totalorder %s26, 0
      %p42 = por %p40, %p41
      %p43 = scmp.ne.s32.totalorder %s31, %s32
      %p44 = scmp.eq.s32.totalorder %s27, 2
      %p45 = por %p43, %p44
      %p47 = scmp.ne.s32.totalorder %s32, %s46
      %p48 = scmp.eq.s32.totalorder %s27, 0
      %p49 = por %p47, %p48
      %s51 = sadd.s32 %s50, 1
      %p54 = scmp.eq.s32.totalorder %s21, 2
      %p55 = scmp.ne.s32.totalorder %s50, %s52
      %p56 = scmp.eq.s32.totalorder %s21, 0
      %p57 = por %p55, %p56
      %p58 = scmp.ne.s32.totalorder %s50, %s52
      %p59 = scmp.eq.s32.totalorder %s26, 2
      %p60 = por %p58, %p59
      %p61 = scmp.ne.s32.totalorder %s52, %s53
      %p62 = scmp.eq.s32.totalorder %s26, 0
      %p63 = por %p61, %p62
      %p64 = scmp.ne.s32.totalorder %s52, %s53
      %p65 = scmp.eq.s32.totalorder %s27, 2
      %p66 = por %p64, %p65
      %p68 = scmp.ne.s32.totalorder %s53, %s67
      %p69 = scmp.eq.s32.totalorder %s27, 0
      %p70 = por %p68, %p69
      %s71 = ssub.s32 %s21, %s28
      %p72 = scmp.eq.s32.totalorder %s71, 0
      %s74 = sadd.s32 %s73, 1
      %s75 = scalar_select %p72, %s73, %s74
      %p78 = pneg %p72
      %p79 = scmp.eq.s32.totalorder %s21, 2
      %p80 = por %p78, %p79
      %p81 = scmp.ne.s32.totalorder %s73, %s76
      %p82 = scmp.eq.s32.totalorder %s21, 0
      %p83 = por %p81, %p82
      %p84 = scmp.ne.s32.totalorder %s73, %s76
      %p85 = scmp.eq.s32.totalorder %s26, 2
      %p86 = por %p84, %p85
      %p87 = scmp.ne.s32.totalorder %s76, %s77
      %p88 = scmp.eq.s32.totalorder %s26, 0
      %p89 = por %p87, %p88
      %p90 = scmp.ne.s32.totalorder %s76, %s77
      %p91 = scmp.eq.s32.totalorder %s27, 2
      %p92 = por %p90, %p91
      %p94 = scmp.ne.s32.totalorder %s77, %s93
      %p95 = scmp.eq.s32.totalorder %s27, 0
      %p96 = por %p94, %p95
      %s97 = ssub.s32 %s21, %s28
      %p98 = scmp.eq.s32.totalorder %s97, 0
      %s100 = sadd.s32 %s99, 1
      %s101 = scalar_select %p98, %s99, %s100
      %p104 = pneg %p98
      %p105 = scmp.eq.s32.totalorder %s21, 2
      %p106 = por %p104, %p105
      %p107 = scmp.ne.s32.totalorder %s99, %s102
      %p108 = scmp.eq.s32.totalorder %s21, 0
      %p109 = por %p107, %p108
      %p110 = scmp.ne.s32.totalorder %s99, %s102
      %p111 = scmp.eq.s32.totalorder %s26, 2
      %p112 = por %p110, %p111
      %p113 = scmp.ne.s32.totalorder %s102, %s103
      %p114 = scmp.eq.s32.totalorder %s26, 0
      %p115 = por %p113, %p114
      %p116 = scmp.ne.s32.totalorder %s102, %s103
      %p117 = scmp.eq.s32.totalorder %s27, 2
      %p118 = por %p116, %p117
      %p120 = scmp.ne.s32.totalorder %s103, %s119
      %p121 = scmp.eq.s32.totalorder %s27, 0
      %p122 = por %p120, %p121
      %s123 = ssub.s32 %s21, %s28
      %p124 = scmp.eq.s32.totalorder %s123, 0
      %s126 = sadd.s32 %s125, 1
      %s127 = scalar_select %p124, %s125, %s126
      %p130 = pneg %p124
      %p131 = scmp.eq.s32.totalorder %s21, 2
      %p132 = por %p130, %p131
      %p133 = scmp.ne.s32.totalorder %s125, %s128
      %p134 = scmp.eq.s32.totalorder %s21, 0
      %p135 = por %p133, %p134
      %p136 = scmp.ne.s32.totalorder %s125, %s128
      %p137 = scmp.eq.s32.totalorder %s26, 2
      %p138 = por %p136, %p137
      %p139 = scmp.ne.s32.totalorder %s128, %s129
      %p140 = scmp.eq.s32.totalorder %s26, 0
      %p141 = por %p139, %p140
      %p142 = scmp.ne.s32.totalorder %s128, %s129
      %p143 = scmp.eq.s32.totalorder %s27, 2
      %p144 = por %p142, %p143
      %p146 = scmp.ne.s32.totalorder %s129, %s145
      %p147 = scmp.eq.s32.totalorder %s27, 0
      %p148 = por %p146, %p147
      %s149 = ssub.s32 %s21, %s28
      %p150 = scmp.eq.s32.totalorder %s149, 0
      %s152 = sadd.s32 %s151, 1
      %s153 = scalar_select %p150, %s151, %s152
      %p156 = pneg %p150
      %p157 = scmp.eq.s32.totalorder %s21, 2
      %p158 = por %p156, %p157
      %p159 = scmp.ne.s32.totalorder %s151, %s154
      %p160 = scmp.eq.s32.totalorder %s21, 0
      %p161 = por %p159, %p160
      %p162 = scmp.ne.s32.totalorder %s151, %s154
      %p163 = scmp.eq.s32.totalorder %s26, 2
      %p164 = por %p162, %p163
      %p165 = scmp.ne.s32.totalorder %s154, %s155
      %p166 = scmp.eq.s32.totalorder %s26, 0
      %p167 = por %p165, %p166
      %p168 = scmp.ne.s32.totalorder %s154, %s155
      %p169 = scmp.eq.s32.totalorder %s27, 2
      %p170 = por %p168, %p169
      %p172 = scmp.ne.s32.totalorder %s155, %s171
      %p173 = scmp.eq.s32.totalorder %s27, 0
      %p174 = por %p172, %p173
      %s175 = ssub.s32 %s21, %s28
      %p176 = scmp.eq.s32.totalorder %s175, 0
      %s178 = sadd.s32 %s177, 1
      %s179 = scalar_select %p176, %s177, %s178
      %p182 = pneg %p176
      %p183 = scmp.eq.s32.totalorder %s21, 2
      %p184 = por %p182, %p183
      %p185 = scmp.ne.s32.totalorder %s177, %s180
      %p186 = scmp.eq.s32.totalorder %s21, 0
      %p187 = por %p185, %p186
      %p188 = scmp.ne.s32.totalorder %s177, %s180
      %p189 = scmp.eq.s32.totalorder %s26, 2
      %p190 = por %p188, %p189
      %p191 = scmp.ne.s32.totalorder %s180, %s181
      %p192 = scmp.eq.s32.totalorder %s26, 0
      %p193 = por %p191, %p192
      %p194 = scmp.ne.s32.totalorder %s180, %s181
      %p195 = scmp.eq.s32.totalorder %s27, 2
      %p196 = por %p194, %p195
      %p198 = scmp.ne.s32.totalorder %s181, %s197
      %p199 = scmp.eq.s32.totalorder %s27, 0
      %p200 = por %p198, %p199
      %p201 = scmp.le.s32.totalorder 1, %s21
      %p202 = scmp.lt.s32.totalorder %s21, 4
      %p203 = pnand %p201, %p202
      %p204 = pneg %p203
      // Predicated region
      $region9: #{tpu_custom_call.1} parent=5 // pred_check
        _
      $region10: #{tpu_custom_call.1} parent=5 // pred_check_branch
        %206 = sbr.rel (%p203) target = $region12
      $region11: #{tpu_custom_call.1} parent=5 // pred_region
        %s207 = ssub.s32 %s21, 1
        // Predicated region
        $region13: #{tpu_custom_call.1} parent=11 // pred_check
          %p208 = pneg %p42
        $region14: #{tpu_custom_call.1} parent=11 // pred_check_branch
          %210 = sbr.rel (%p208) target = $region16
        $region15: #{tpu_custom_call.1} parent=11 // pred_region
          %212 = vsyncadd [#allocation3], 0
          %s214 = sshll.u32 %s0, 4
          %s215 = int_to_ptr.hbm [resolvable:$true] %s214
          %s216 = sshll.u32 [#allocation2], 4
          %s217 = int_to_ptr.vmem [resolvable:$true] %s216
          %219 = dma.hbm_to_vmem [thread:$0]  %s215, 128, %s217, [#allocation3]
        $region16: #{tpu_custom_call.1} parent=11 // pred_fallthru
          _
        // Predicated region
        $region17: #{tpu_custom_call.1} parent=11 // pred_check
          %p220 = pneg %p63
        $region18: #{tpu_custom_call.1} parent=11 // pred_check_branch
          %222 = sbr.rel (%p220) target = $region20
        $region19: #{tpu_custom_call.1} parent=11 // pred_region
          %224 = vsyncadd [#allocation6], 0
          %s226 = sshll.u32 %s1, 4
          %s227 = int_to_ptr.hbm [resolvable:$true] %s226
          %s228 = sshll.u32 [#allocation5], 4
          %s229 = int_to_ptr.vmem [resolvable:$true] %s228
          %231 = dma.hbm_to_vmem [thread:$0]  %s227, 128, %s229, [#allocation6]
        $region20: #{tpu_custom_call.1} parent=11 // pred_fallthru
          _
      $region12: #{tpu_custom_call.1} parent=5 // pred_fallthru
        _
      %p232 = scmp.lt.s32.totalorder %s21, 3
      // Predicated region
      $region21: #{tpu_custom_call.1} parent=5 // pred_check
        %p233 = pneg %p232
      $region22: #{tpu_custom_call.1} parent=5 // pred_check_branch
        %235 = sbr.rel (%p233) target = $region24
      $region23: #{tpu_custom_call.1} parent=5 // pred_region
        // Predicated region
        $region25: #{tpu_custom_call.1} parent=23 // pred_check
          %p236 = pneg %p83
        $region26: #{tpu_custom_call.1} parent=23 // pred_check_branch
          %238 = sbr.rel (%p236) target = $region28
        $region27: #{tpu_custom_call.1} parent=23 // pred_region
          %s239 = sand.u32 %s21, 1
          %s240 = scalar_lea.sflag [#allocation3], %s239
          %s241 = sand.u32 %s73, 1
          %s242 = smul.addr %s241, 128
          %s243 = scalar_lea.vmem [#allocation7], %s242
          %245 = vsyncadd %s240, 0
          %s246 = smul.addr %s21, 16
          %s247 = smul.addr %s246, 8
          %s248 = scalar_lea.hbm %s2, %s247
          %s249 = sshll.u32 %s248, 4
          %s250 = int_to_ptr.hbm [resolvable:$true] %s249
          %s251 = sshll.u32 %s243, 4
          %s252 = int_to_ptr.vmem [resolvable:$true] %s251
          %257 = dma.hbm_to_vmem [thread:$0]  %s250, 2048, %s252, %s240, 128, 128, 8
        $region28: #{tpu_custom_call.1} parent=23 // pred_fallthru
          _
        // Predicated region
        $region29: #{tpu_custom_call.1} parent=23 // pred_check
          %p258 = pneg %p109
        $region30: #{tpu_custom_call.1} parent=23 // pred_check_branch
          %260 = sbr.rel (%p258) target = $region32
        $region31: #{tpu_custom_call.1} parent=23 // pred_region
          %s261 = sand.u32 %s21, 1
          %s262 = scalar_lea.sflag [#allocation3], %s261
          %s263 = sand.u32 %s99, 1
          %s264 = scalar_lea.vmem [#allocation8], %s263
          %266 = vsyncadd %s262, 0
          %s267 = scalar_lea.hbm %s3, %s21
          %s269 = sshll.u32 %s267, 4
          %s270 = int_to_ptr.hbm [resolvable:$true] %s269
          %s271 = sshll.u32 %s264, 4
          %s272 = int_to_ptr.vmem [resolvable:$true] %s271
          %274 = dma.hbm_to_vmem [thread:$0]  %s270, 16, %s272, %s262
        $region32: #{tpu_custom_call.1} parent=23 // pred_fallthru
          _
      $region24: #{tpu_custom_call.1} parent=5 // pred_fallthru
        _
      %p275 = scmp.le.s32.totalorder 1, %s21
      %p276 = scmp.lt.s32.totalorder %s21, 4
      %p277 = pnand %p275, %p276
      %p278 = pneg %p277
      // Predicated region
      $region33: #{tpu_custom_call.1} parent=5 // pred_check
        _
      $region34: #{tpu_custom_call.1} parent=5 // pred_check_branch
        %280 = sbr.rel (%p277) target = $region36
      $region35: #{tpu_custom_call.1} parent=5 // pred_region
        %s281 = ssub.s32 %s21, 1
        // Predicated region
        $region37: #{tpu_custom_call.1} parent=35 // pred_check
          %p282 = pneg %p42
        $region38: #{tpu_custom_call.1} parent=35 // pred_check_branch
          %284 = sbr.rel (%p282) target = $region40
        $region39: #{tpu_custom_call.1} parent=35 // pred_region
          %286 = dma.done [#allocation3], 128
        $region40: #{tpu_custom_call.1} parent=35 // pred_fallthru
          _
        // Predicated region
        $region41: #{tpu_custom_call.1} parent=35 // pred_check
          %p287 = pneg %p63
        $region42: #{tpu_custom_call.1} parent=35 // pred_check_branch
          %289 = sbr.rel (%p287) target = $region44
        $region43: #{tpu_custom_call.1} parent=35 // pred_region
          %291 = dma.done [#allocation6], 128
        $region44: #{tpu_custom_call.1} parent=35 // pred_fallthru
          _
        %s292 = sand.u32 %s26, 1
        %s293 = scalar_lea.sflag [#allocation3], %s292
        %s294 = sand.u32 %s76, 1
        %s295 = smul.addr %s294, 128
        %s296 = scalar_lea.vmem [#allocation7], %s295
        // Predicated region
        $region45: #{tpu_custom_call.1} parent=35 // pred_check
          %p297 = pneg %p89
        $region46: #{tpu_custom_call.1} parent=35 // pred_check_branch
          %299 = sbr.rel (%p297) target = $region48
        $region47: #{tpu_custom_call.1} parent=35 // pred_region
          %301 = dma.done %s293, 2048
        $region48: #{tpu_custom_call.1} parent=35 // pred_fallthru
          _
        %s302 = sand.u32 %s26, 1
        %s303 = scalar_lea.sflag [#allocation3], %s302
        %s304 = sand.u32 %s102, 1
        %s305 = scalar_lea.vmem [#allocation8], %s304
        // Predicated region
        $region49: #{tpu_custom_call.1} parent=35 // pred_check
          %p306 = pneg %p115
        $region50: #{tpu_custom_call.1} parent=35 // pred_check_branch
          %308 = sbr.rel (%p306) target = $region52
        $region51: #{tpu_custom_call.1} parent=35 // pred_region
          %310 = dma.done %s303, 16
        $region52: #{tpu_custom_call.1} parent=35 // pred_fallthru
          _
        %p311 = pneg %p42
        %p312 = pneg %p39
        %p313 = pneg %p63
        %p314 = pneg %p60
        %s315 = sand.u32 %s26, 1
        %s316 = scalar_lea.sflag [#allocation3], %s315
        %s317 = sand.u32 %s76, 1
        %s318 = smul.addr %s317, 128
        %s319 = scalar_lea.vmem [#allocation7], %s318
        %p320 = pneg %p89
        %p321 = pneg %p86
        %s322 = sand.u32 %s26, 1
        %s323 = scalar_lea.sflag [#allocation3], %s322
        %s324 = sand.u32 %s102, 1
        %s325 = scalar_lea.vmem [#allocation8], %s324
        %p326 = pneg %p115
        %p327 = pneg %p112
        %p328 = pneg %p141
        %p329 = pneg %p138
        %s330 = sand.u32 %s128, 1
        %s331 = scalar_lea.sflag [#allocation4], %s330
        %s332 = sand.u32 %s128, 1
        %s333 = scalar_lea.vmem [#allocation9], %s332
        %p334 = pneg %p167
        %p335 = pneg %p164
        %s336 = sand.u32 %s26, 1
        %s337 = scalar_lea.sflag [#allocation11], %s336
        %s338 = sand.u32 %s154, 1
        %s339 = scalar_lea.vmem [#allocation10], %s338
        %p340 = pneg %p193
        %p341 = pneg %p190
        %s342 = sand.u32 %s26, 1
        %s343 = scalar_lea.sflag [#allocation11], %s342
        %s344 = sand.u32 %s180, 1
        %s345 = scalar_lea.vmem [#allocation12], %s344
        %v347 = vld [vmem:[%s296] sm:$0xff]
        %v348 = vld [vmem:[%s296 + $0x8] sm:$0xff]
        %v349 = vld [vmem:[%s296 + $0x10] sm:$0xff]
        %v350 = vld [vmem:[%s296 + $0x18] sm:$0xff]
        %v351 = vld [vmem:[%s296 + $0x20] sm:$0xff]
        %v352 = vld [vmem:[%s296 + $0x28] sm:$0xff]
        %v353 = vld [vmem:[%s296 + $0x30] sm:$0xff]
        %v354 = vld [vmem:[%s296 + $0x38] sm:$0xff]
        %v355 = vld [vmem:[%s296 + $0x40] sm:$0xff]
        %v356 = vld [vmem:[%s296 + $0x48] sm:$0xff]
        %v357 = vld [vmem:[%s296 + $0x50] sm:$0xff]
        %v358 = vld [vmem:[%s296 + $0x58] sm:$0xff]
        %v359 = vld [vmem:[%s296 + $0x60] sm:$0xff]
        %v360 = vld [vmem:[%s296 + $0x68] sm:$0xff]
        %v361 = vld [vmem:[%s296 + $0x70] sm:$0xff]
        %v362 = vld [vmem:[%s296 + $0x78] sm:$0xff]
        %v363 = vld [vmem:[%s305] sm:$0x1]
        %v364 = vld [vmem:[#allocation2] sm:$0xff]
        %v366 = vperm.slane %v363, 0
        %368 = vmatpush.msra.mxu0 %v362
        %369 = vmatpush.msra.mxu0 %v361
        %370 = vmatpush.msra.mxu0 %v360
        %371 = vmatpush.msra.mxu0 %v359
        %372 = vmatpush.msra.mxu0 %v358
        %373 = vmatpush.msra.mxu0 %v357
        %374 = vmatpush.msra.mxu0 %v356
        %375 = vmatpush.msra.mxu0 %v355
        %376 = vmatpush.msra.mxu0 %v354
        %377 = vmatpush.msra.mxu0 %v353
        %378 = vmatpush.msra.mxu0 %v352
        %379 = vmatpush.msra.mxu0 %v351
        %380 = vmatpush.msra.mxu0 %v350
        %381 = vmatpush.msra.mxu0 %v349
        %382 = vmatpush.msra.mxu0 %v348
        %383 = vmatpush.msra.mxu0 %v347
        %384 = vmatmul.f32.gmra.mxu0 %v364
        %v385 = vpop.f32.mrf.mxu0
        %v386 = vadd.f32 %v366, %v385
        %387 = vdwg.mxu0
        %v388 = vld [vmem:[#allocation5] sm:$0xff]
        %389 = vmatpush.msra.mxu0 %v362
        %390 = vmatpush.msra.mxu0 %v361
        %391 = vmatpush.msra.mxu0 %v360
        %392 = vmatpush.msra.mxu0 %v359
        %393 = vmatpush.msra.mxu0 %v358
        %394 = vmatpush.msra.mxu0 %v357
        %395 = vmatpush.msra.mxu0 %v356
        %396 = vmatpush.msra.mxu0 %v355
        %397 = vmatpush.msra.mxu0 %v354
        %398 = vmatpush.msra.mxu0 %v353
        %399 = vmatpush.msra.mxu0 %v352
        %400 = vmatpush.msra.mxu0 %v351
        %401 = vmatpush.msra.mxu0 %v350
        %402 = vmatpush.msra.mxu0 %v349
        %403 = vmatpush.msra.mxu0 %v348
        %404 = vmatpush.msra.mxu0 %v347
        %405 = vmatmul.f32.gmra.mxu0 %v388
        %v406 = vpop.f32.mrf.mxu0
        %v407 = vadd.f32 %v366, %v406
        %408 = vdwg.mxu0
        %v409 = vmul.f32 %v386, %v386
        %410 = vadd.xlane.f32.xlu0 %v409
        %v411 = vpop.xlane.xlu0 %410
        %v412 = vmul.f32 %v407, %v407
        %413 = vadd.xlane.f32.xlu0 %v412
        %v414 = vpop.xlane.xlu0 %413
        %v415 = vmax.f32 %v411, 1e-16
        %v416 = vrsqrt.pop %v415
        %v417 = vmul.f32 %v416, %v415
        %v418 = vmul.f32 %v417, %v416
        %v419 = vmul.f32 0.5, %v418
        %v420 = vsub.f32 1.5, %v419
        %v421 = vmul.f32 %v416, %v420
        %vm422 = vweird.f32 %v415
        %vm423 = vweird.f32 %v416
        %vm424 = vmor %vm422, %vm423
        %v425 = vsel %vm424, %v416, %v421
        %v426 = vmul.f32 %v386, %v425
        %v427 = vmax.f32 %v414, 1e-16
        %v428 = vrsqrt.pop %v427
        %v429 = vmul.f32 %v428, %v427
        %v430 = vmul.f32 %v429, %v428
        %v431 = vmul.f32 0.5, %v430
        %v432 = vsub.f32 1.5, %v431
        %v433 = vmul.f32 %v428, %v432
        %vm434 = vweird.f32 %v427
        %vm435 = vweird.f32 %v428
        %vm436 = vmor %vm434, %vm435
        %v437 = vsel %vm436, %v428, %v433
        %v438 = vmul.f32 %v407, %v437
        %v439 = vmul.f32 %v426, %v438
        %440 = vadd.xlane.f32.xlu0 %v439
        %v441 = vpop.xlane.xlu0 %440
        %v442 = vpack.c.bf16 %v426, %v426
        %443 = vmatpush.bf16.xpose.msra.mxu0 0
        %444 = vmatpush.bf16.xpose.msra.mxu0 0
        %445 = vmatpush.bf16.xpose.msra.mxu0 0
        %446 = vmatpush.bf16.xpose.msra.mxu0 0
        %447 = vmatpush.bf16.xpose.msra.mxu0 0
        %448 = vmatpush.bf16.xpose.msra.mxu0 0
        %449 = vmatpush.bf16.xpose.msra.mxu0 0
        %450 = vmatpush.bf16.xpose.msra.mxu0 %v442
        %451 = vmatmul.bf16.gmra.mxu0 %v442
        %v452 = vpop.f32.mrf.mxu0
        %v453 = vadd.f32 0.0, %v452
        %v454 = vpop.f32.mrf.mxu0
        %455 = vdwg.mxu0
        %v456 = vlaneseq
        %v457 = vshrl.u32 %v456, 7
        %v458 = vlaneseq
        %v459 = vand.u32 %v458, 127
        %v460 = vmul.f32 %v453, 2.0
        %v461 = vmul.f32 %v460, 1.442695
        %v462 = vpow.pop %v461
        %vm463 = vcmp.ne.s32.totalorder %v457, %v459
        %v464 = vsel %vm463, %v462, 0.0
        %vm465 = vcmask 64512
        %v466 = vsel %vm465, %v464, 0.0
        %467 = vadd.xlane.f32.xlu0 %v466
        %v468 = vpop.xlane.xlu0 %467
        %v469 = vrot.slane %v468, 4
        %v470 = vadd.f32 %v468, %v469
        %v471 = vrot.slane %v470, 2
        %v472 = vadd.f32 %v470, %v471
        %v473 = vrot.slane %v472, 1
        %v474 = vadd.f32 %v472, %v473
        %v475 = vmul.f32 %v441, 2.0
        %v476 = vmul.f32 %v475, 1.442695
        %v477 = vpow.pop %v476
        %v478 = vadd.f32 %v477, %v474
        %v479 = vlog2.pop %v478
        %v480 = vmul.f32 %v479, 0.6931472
        %v481 = vsub.f32 %v475, %v480
        %v482 = vrot.slane %v481, 4
        %v483 = vadd.f32 %v481, %v482
        %v484 = vrot.slane %v483, 2
        %v485 = vadd.f32 %v483, %v484
        %v486 = vrot.slane %v485, 1
        %v487 = vadd.f32 %v485, %v486
        %v488 = vsub.f32 0.0, %v487
        %v489 = vmul.f32 %v488, 0.125
        %vm490 = vcmp.gt.s32.totalorder %v459, %v457
        %vm491 = vcmp.ne.f32.partialorder %v453, 0.0
        %vm492 = vmand %vm490, %vm491
        %v493 = vsel %vm492, %v453, 0.0
        %v494 = vsel %vm465, %v493, 0.0
        %495 = vadd.xlane.f32.xlu0 %v494
        %v496 = vpop.xlane.xlu0 %495
        %v497 = vrot.slane %v496, 4
        %v498 = vadd.f32 %v496, %v497
        %v499 = vrot.slane %v498, 2
        %v500 = vadd.f32 %v498, %v499
        %v501 = vrot.slane %v500, 1
        %v502 = vadd.f32 %v500, %v501
        %v503 = vsel %vm492, 1.0, 0.0
        %v504 = vsel %vm465, %v503, 0.0
        %505 = vadd.xlane.f32.xlu0 %v504
        %v506 = vpop.xlane.xlu0 %505
        %v507 = vrot.slane %v506, 4
        %v508 = vadd.f32 %v506, %v507
        %v509 = vrot.slane %v508, 2
        %v510 = vadd.f32 %v508, %v509
        %v511 = vrot.slane %v510, 1
        %v512 = vadd.f32 %v510, %v511
        %v513 = vmax.f32 %v512, 1.0
        %v514 = vrcp.pop %v513
        %v515 = vmul.f32 %v513, %v514
        %v516 = vsub.f32 1.0, %v515
        %v517 = vmul.f32 %v514, %v516
        %v518 = vadd.f32 %v514, %v517
        %vm519 = vweird.f32 %v513
        %vm520 = vweird.f32 %v514
        %vm521 = vmor %vm519, %vm520
        %v522 = vsel %vm521, %v514, %v518
        %v523 = vand.u32 2147483647, %v513
        %vm524 = vcmp.eq.f32.partialorder %v523, 8.507059e+37
        %v525 = vand.u32 %v513, 2147483648
        %v526 = vor.u32 1.1754944e-38, %v525
        %v527 = vsel %vm524, %v526, %v522
        %v528 = vmul.f32 %v502, %v527
        %v529 = vrot.slane %v386, 4
        %v530 = vadd.f32 %v386, %v529
        %v531 = vrot.slane %v530, 2
        %v532 = vadd.f32 %v530, %v531
        %v533 = vrot.slane %v532, 1
        %v534 = vadd.f32 %v532, %v533
        %v535 = vmul.f32 %v534, 0.125
        %536 = vst [vmem:[%s333] sm:$0x1] %v535
        %v537 = vrot.slane %v426, 4
        %v538 = vadd.f32 %v426, %v537
        %v539 = vrot.slane %v538, 2
        %v540 = vadd.f32 %v538, %v539
        %v541 = vrot.slane %v540, 1
        %v542 = vadd.f32 %v540, %v541
        %v543 = vmul.f32 %v542, 0.125
        %544 = vst [vmem:[%s339] sm:$0x1] %v543
        %vm545 = vcmp.eq.s32.totalorder %v459, 0
        %v546 = vsel %vm545, %v489, 0.0
        %vm547 = vcmp.eq.s32.totalorder %v459, 1
        %v548 = vsel %vm547, %v528, 0.0
        %v549 = vadd.f32 %v546, %v548
        %550 = vst [vmem:[%s345] sm:$0x1] %v549
        %s551 = sand.u32 %s128, 1
        %s552 = scalar_lea.sflag [#allocation4], %s551
        %s553 = sand.u32 %s128, 1
        %s554 = scalar_lea.vmem [#allocation9], %s553
        %s555 = sand.u32 %s26, 1
        %s556 = scalar_lea.sflag [#allocation11], %s555
        %s557 = sand.u32 %s154, 1
        %s558 = scalar_lea.vmem [#allocation10], %s557
        %s559 = sand.u32 %s26, 1
        %s560 = scalar_lea.sflag [#allocation11], %s559
        %s561 = sand.u32 %s180, 1
        %s562 = scalar_lea.vmem [#allocation12], %s561
        // Predicated region
        $region53: #{tpu_custom_call.1} parent=35 // pred_check
          %p563 = pneg %p138
        $region54: #{tpu_custom_call.1} parent=35 // pred_check_branch
          %565 = sbr.rel (%p563) target = $region56
        $region55: #{tpu_custom_call.1} parent=35 // pred_region
          %567 = vsyncadd %s552, 0
          %s568 = scalar_lea.hbm %s4, %s26
          %s570 = sshll.u32 %s554, 4
          %s571 = int_to_ptr.vmem [resolvable:$true] %s570
          %s572 = sshll.u32 %s568, 4
          %s573 = int_to_ptr.hbm [resolvable:$true] %s572
          %575 = dma.vmem_to_hbm [thread:$0]  %s571, 16, %s573, %s552
        $region56: #{tpu_custom_call.1} parent=35 // pred_fallthru
          _
        // Predicated region
        $region57: #{tpu_custom_call.1} parent=35 // pred_check
          %p576 = pneg %p164
        $region58: #{tpu_custom_call.1} parent=35 // pred_check_branch
          %578 = sbr.rel (%p576) target = $region60
        $region59: #{tpu_custom_call.1} parent=35 // pred_region
          %580 = vsyncadd %s556, 0
          %s581 = scalar_lea.hbm %s5, %s26
          %s583 = sshll.u32 %s558, 4
          %s584 = int_to_ptr.vmem [resolvable:$true] %s583
          %s585 = sshll.u32 %s581, 4
          %s586 = int_to_ptr.hbm [resolvable:$true] %s585
          %588 = dma.vmem_to_hbm [thread:$0]  %s584, 16, %s586, %s556
        $region60: #{tpu_custom_call.1} parent=35 // pred_fallthru
          _
        // Predicated region
        $region61: #{tpu_custom_call.1} parent=35 // pred_check
          %p589 = pneg %p190
        $region62: #{tpu_custom_call.1} parent=35 // pred_check_branch
          %591 = sbr.rel (%p589) target = $region64
        $region63: #{tpu_custom_call.1} parent=35 // pred_region
          %593 = vsyncadd %s560, 0
          %s594 = scalar_lea.hbm %s6, %s26
          %s596 = sshll.u32 %s562, 4
          %s597 = int_to_ptr.vmem [resolvable:$true] %s596
          %s598 = sshll.u32 %s594, 4
          %s599 = int_to_ptr.hbm [resolvable:$true] %s598
          %601 = dma.vmem_to_hbm [thread:$0]  %s597, 16, %s599, %s560
        $region64: #{tpu_custom_call.1} parent=35 // pred_fallthru
          _
      $region36: #{tpu_custom_call.1} parent=5 // pred_fallthru
        _
      %p602 = scmp.le.s32.totalorder 2, %s21
      // Predicated region
      $region65: #{tpu_custom_call.1} parent=5 // pred_check
        %p603 = pneg %p602
      $region66: #{tpu_custom_call.1} parent=5 // pred_check_branch
        %605 = sbr.rel (%p603) target = $region68
      $region67: #{tpu_custom_call.1} parent=5 // pred_region
        %s606 = ssub.s32 %s21, 2
        // Predicated region
        $region69: #{tpu_custom_call.1} parent=67 // pred_check
          %p607 = pneg %p144
        $region70: #{tpu_custom_call.1} parent=67 // pred_check_branch
          %609 = sbr.rel (%p607) target = $region72
        $region71: #{tpu_custom_call.1} parent=67 // pred_region
          %s610 = sand.u32 %s129, 1
          %s611 = scalar_lea.sflag [#allocation4], %s610
          %s612 = sand.u32 %s129, 1
          %s613 = scalar_lea.vmem [#allocation9], %s612
          %615 = dma.done %s611, 16
        $region72: #{tpu_custom_call.1} parent=67 // pred_fallthru
          _
        // Predicated region
        $region73: #{tpu_custom_call.1} parent=67 // pred_check
          %p616 = pneg %p170
        $region74: #{tpu_custom_call.1} parent=67 // pred_check_branch
          %618 = sbr.rel (%p616) target = $region76
        $region75: #{tpu_custom_call.1} parent=67 // pred_region
          %s619 = sand.u32 %s27, 1
          %s620 = scalar_lea.sflag [#allocation11], %s619
          %s621 = sand.u32 %s155, 1
          %s622 = scalar_lea.vmem [#allocation10], %s621
          %624 = dma.done %s620, 16
        $region76: #{tpu_custom_call.1} parent=67 // pred_fallthru
          _
        // Predicated region
        $region77: #{tpu_custom_call.1} parent=67 // pred_check
          %p625 = pneg %p196
        $region78: #{tpu_custom_call.1} parent=67 // pred_check_branch
          %627 = sbr.rel (%p625) target = $region80
        $region79: #{tpu_custom_call.1} parent=67 // pred_region
          %s628 = sand.u32 %s27, 1
          %s629 = scalar_lea.sflag [#allocation11], %s628
          %s630 = sand.u32 %s181, 1
          %s631 = scalar_lea.vmem [#allocation12], %s630
          %633 = dma.done %s629, 16
        $region80: #{tpu_custom_call.1} parent=67 // pred_fallthru
          _
      $region68: #{tpu_custom_call.1} parent=5 // pred_fallthru
        _
    $region6: #{tpu_custom_call.1} parent=1 // loop_footer
      %s25 = sadd.s32 1, %s21
    $region7: #{tpu_custom_call.1} parent=1 // loop_footer_branch
      %20 = sbr.rel target = $region3
    $region8: #{tpu_custom_call.1} parent=1 // loop_exit
      _
    %634 = vsyncpa [#allocation3], 1
    %s635 = scalar_lea.sflag [#allocation3], 1
    %636 = vsyncpa %s635, 1
    %637 = vsyncpa [#allocation6], 1
    %638 = vsyncpa [#allocation4], 1
    %s639 = scalar_lea.sflag [#allocation4], 1
    %640 = vsyncpa %s639, 1
    %641 = vsyncpa [#allocation11], 1
    %s642 = scalar_lea.sflag [#allocation11], 1
    %643 = vsyncpa %s642, 1

</llo_original>
